<compile_context>
chip_gen: v5e
topology: v5e:2x2
jax: 0.10.0
libtpu: 0.0.40
codegen_flags: <defaults>
</compile_context>

<pallas_src>
import functools

import jax
import jax.numpy as jnp
from jax.experimental import pallas as pl
from jax.experimental.pallas import tpu as pltpu


def _round_up(x, m):
    return (x + m - 1) // m * m


# --------------------------------------------------------------------------- #
# Pallas kernel: tiled  patches @ (W*scale)  (+ shift, LeakyReLU on last K step)
# --------------------------------------------------------------------------- #
def _gemm_bn_lrelu_kernel(patches_ref, w_ref, shift_ref, out_ref, acc_ref):
    # patches_ref: (TM, TK) bf16    w_ref: (TK, TN) bf16 (BN scale pre-folded)
    # shift_ref:   (1, TN)  f32     out_ref: (TM, TN) f32    acc_ref: (TM, TN) f32
    k = pl.program_id(2)

    @pl.when(k == 0)
    def _init():
        acc_ref[...] = jnp.zeros_like(acc_ref)

    acc_ref[...] += jnp.dot(
        patches_ref[...], w_ref[...], preferred_element_type=jnp.float32
    )

    @pl.when(k == pl.num_programs(2) - 1)
    def _finalize():
        y = acc_ref[...] + shift_ref[...]
        # LeakyReLU(0.1) as a single max (for y<0, 0.1*y > y).
        out_ref[...] = jnp.maximum(y, 0.1 * y).astype(out_ref.dtype)


def _fused_gemm_bn_lrelu(patches, w_scaled, shift):
    """patches: (M, KKC) f32, w_scaled: (KKC, Cout) f32, shift: (Cout,) f32."""
    M, KKC = patches.shape
    Cout = w_scaled.shape[1]

    # ---- tile sizes (MXU / lane aligned, sized well under 32 MiB VMEM) ---- #
    TM = 512 if M >= 512 else _round_up(M, 8)
    M_pad = _round_up(M, TM)

    TN = 256 if Cout > 128 else 128
    N_pad = _round_up(Cout, TN)

    KKC_pad = _round_up(KKC, 128)
    if KKC_pad <= 1024:
        TK = KKC_pad
    else:
        KKC_pad = _round_up(KKC, 512)
        TK = 512

    # ---- pad operands to tile multiples; bf16 MXU inputs, f32 accumulate ---- #
    patches_p = jnp.pad(
        patches, ((0, M_pad - M), (0, KKC_pad - KKC))
    ).astype(jnp.bfloat16)
    w_p = jnp.pad(
        w_scaled, ((0, KKC_pad - KKC), (0, N_pad - Cout))
    ).astype(jnp.bfloat16)
    shift_p = jnp.pad(shift, (0, N_pad - Cout)).reshape(1, N_pad).astype(jnp.float32)

    grid = (M_pad // TM, N_pad // TN, KKC_pad // TK)

    grid_spec = pltpu.PrefetchScalarGridSpec(
        num_scalar_prefetch=0,
        grid=grid,
        in_specs=[
            pl.BlockSpec((TM, TK), lambda i, j, k: (i, k)),
            pl.BlockSpec((TK, TN), lambda i, j, k: (k, j)),
            # shift ignores the M/K grid indices -> stays resident per N tile.
            pl.BlockSpec((1, TN), lambda i, j, k: (0, j)),
        ],
        out_specs=pl.BlockSpec((TM, TN), lambda i, j, k: (i, j)),
        scratch_shapes=[pltpu.VMEM((TM, TN), jnp.float32)],
    )

    out_pad = pl.pallas_call(
        _gemm_bn_lrelu_kernel,
        out_shape=jax.ShapeDtypeStruct((M_pad, N_pad), jnp.float32),
        grid_spec=grid_spec,
        compiler_params=pltpu.CompilerParams(
            dimension_semantics=("parallel", "parallel", "arbitrary"),
            vmem_limit_bytes=32 * 1024 * 1024,
        ),
    )(patches_p, w_p, shift_p)

    return out_pad[:M, :Cout]


# --------------------------------------------------------------------------- #
# im2col (glue, plain JAX): NHWC -> (N*Ho*Wo, K*K*Cin)
# --------------------------------------------------------------------------- #
def _im2col(x_nhwc, ksize, stride, padding, dilation):
    N, H, W, C = x_nhwc.shape
    xp = jnp.pad(x_nhwc, ((0, 0), (padding, padding), (padding, padding), (0, 0)))
    Hp, Wp = H + 2 * padding, W + 2 * padding
    eff_k = dilation * (ksize - 1) + 1
    Ho = (Hp - eff_k) // stride + 1
    Wo = (Wp - eff_k) // stride + 1
    cols = []
    for ki in range(ksize):
        for kj in range(ksize):
            patch = xp[
                :,
                ki * dilation: ki * dilation + stride * (Ho - 1) + 1: stride,
                kj * dilation: kj * dilation + stride * (Wo - 1) + 1: stride,
                :,
            ]
            cols.append(patch)
    patches = jnp.concatenate(cols, axis=-1)  # (N, Ho, Wo, K*K*C) ordered [ki, kj, C]
    return patches.reshape(N * Ho * Wo, ksize * ksize * C), Ho, Wo


# --------------------------------------------------------------------------- #
# Module equivalent
# --------------------------------------------------------------------------- #
def conv_bn_leakyrelu(x_nchw, params, *, ksize, padding=0, stride=1, dilation=1):
    """Forward pass of Conv_BN_LeakyReLU.  Input/output are NCHW (PyTorch convention)."""
    w = params["conv_w"]          # (Cout, Cin, K, K)  -- PyTorch layout
    b = params["conv_b"]          # (Cout,)
    gamma = params["bn_gamma"]    # (Cout,)
    beta = params["bn_beta"]      # (Cout,)
    mean = params["bn_mean"]      # (Cout,)
    var = params["bn_var"]        # (Cout,)
    eps = 1e-5

    Cout, Cin = w.shape[0], w.shape[1]
    x_nhwc = jnp.transpose(x_nchw, (0, 2, 3, 1)).astype(jnp.float32)
    patches, Ho, Wo = _im2col(x_nhwc, ksize, stride, padding, dilation)

    # Reorder weight to match patch ordering [ki, kj, Cin] -> (K*K*Cin, Cout)
    w_mat = jnp.transpose(w, (2, 3, 1, 0)).reshape(ksize * ksize * Cin, Cout)
    w_mat = w_mat.astype(jnp.float32)

    # Fold BN into the GEMM: scale goes into the weights, shift stays as epilogue add.
    scale = gamma / jnp.sqrt(var + eps)                  # (Cout,)
    shift = (beta + (b - mean) * scale).astype(jnp.float32)
    w_scaled = w_mat * scale[None, :].astype(jnp.float32)

    out_flat = _fused_gemm_bn_lrelu(patches, w_scaled, shift)  # (N*Ho*Wo, Cout)

    N = x_nchw.shape[0]
    out_nhwc = out_flat.reshape(N, Ho, Wo, Cout)
    return jnp.transpose(out_nhwc, (0, 3, 1, 2))  # back to NCHW


# --------------------------------------------------------------------------- #
# Pure-JAX f32 reference (for correctness check)
# --------------------------------------------------------------------------- #
def _reference(x_nchw, params, *, ksize, padding, stride, dilation):
    w = params["conv_w"].astype(jnp.float32)
    b = params["conv_b"]
    eps = 1e-5
    y = jax.lax.conv_general_dilated(
        x_nchw.astype(jnp.float32), w,
        window_strides=(stride, stride),
        padding=[(padding, padding), (padding, padding)],
        rhs_dilation=(dilation, dilation),
        dimension_numbers=("NCHW", "OIHW", "NCHW"),
    ) + b[None, :, None, None]
    scale = params["bn_gamma"] / jnp.sqrt(params["bn_var"] + eps)
    y = (y - params["bn_mean"][None, :, None, None]) * scale[None, :, None, None] \
        + params["bn_beta"][None, :, None, None]
    return jnp.where(y > 0, y, 0.1 * y)


# --------------------------------------------------------------------------- #
if __name__ == "__main__":
    key = jax.random.PRNGKey(0)
    N, Cin, H, W = 2, 4, 16, 16
    Cout, K = 8, 3

    k_x, k_w, k_b, k_g, k_be, k_m, k_v = jax.random.split(key, 7)
    x = jax.random.normal(k_x, (N, Cin, H, W), dtype=jnp.float32)
    params = {
        "conv_w": jax.random.normal(k_w, (Cout, Cin, K, K), dtype=jnp.float32) * 0.1,
        "conv_b": jax.random.normal(k_b, (Cout,), dtype=jnp.float32) * 0.1,
        "bn_gamma": 1.0 + 0.1 * jax.random.normal(k_g, (Cout,), dtype=jnp.float32),
        "bn_beta": 0.1 * jax.random.normal(k_be, (Cout,), dtype=jnp.float32),
        "bn_mean": 0.1 * jax.random.normal(k_m, (Cout,), dtype=jnp.float32),
        "bn_var": jnp.abs(jax.random.normal(k_v, (Cout,), dtype=jnp.float32)) + 0.5,
    }

    # bf16 MXU inputs -> compare against the f32 reference with a relaxed tolerance.
    TOL = 2e-2

    # Case 1: stride=1, padding=1 (same-size conv)
    fwd1 = jax.jit(functools.partial(
        conv_bn_leakyrelu, ksize=K, padding=1, stride=1, dilation=1))
    out1 = fwd1(x, params)
    jax.block_until_ready(out1)
    ref1 = _reference(x, params, ksize=K, padding=1, stride=1, dilation=1)
    assert out1.shape == (N, Cout, H, W), out1.shape
    assert jnp.allclose(out1, ref1, atol=TOL, rtol=TOL), "mismatch vs reference (s=1)"

    # Case 2: stride=2, padding=1 (downsampling conv, exercises padding/tiling path)
    fwd2 = jax.jit(functools.partial(
        conv_bn_leakyrelu, ksize=K, padding=1, stride=2, dilation=1))
    out2 = fwd2(x, params)
    jax.block_until_ready(out2)
    ref2 = _reference(x, params, ksize=K, padding=1, stride=2, dilation=1)
    assert out2.shape == (N, Cout, H // 2, W // 2), out2.shape
    assert jnp.allclose(out2, ref2, atol=TOL, rtol=TOL), "mismatch vs reference (s=2)"

    print("KERNEL_OK")
</pallas_src>

<mosaic_0001>
module attributes {stable_mosaic.version = 11 : i64} {
  func.func @_gemm_bn_lrelu_kernel(%arg0: i32, %arg1: i32, %arg2: i32, %arg3: memref<512x128xbf16, #tpu.memory_space<vmem>>, %arg4: memref<128x128xbf16, #tpu.memory_space<vmem>>, %arg5: memref<1x128xf32, #tpu.memory_space<vmem>>, %arg6: memref<512x128xf32, #tpu.memory_space<vmem>>, %arg7: memref<512x128xf32, #tpu.memory_space<vmem>>) attributes {dimension_semantics = [#tpu.dimension_semantics<parallel>, #tpu.dimension_semantics<parallel>, #tpu.dimension_semantics<arbitrary>], iteration_bounds = array<i64: 1, 1, 1>, scalar_prefetch = 0 : i64, scratch_operands = 1 : i64, tpu.core_type = #tpu.core_type<tc>, window_params = [{transform_indices = @transform_0, window_bounds = array<i64: 512, 128>}, {transform_indices = @transform_1, window_bounds = array<i64: 128, 128>}, {transform_indices = @transform_2, window_bounds = array<i64: 1, 128>}, {transform_indices = @transform_3, window_bounds = array<i64: 512, 128>}]} {
    %c0_i32 = arith.constant 0 : i32
    %0 = arith.cmpi eq, %arg2, %c0_i32 : i32
    %1 = arith.extui %0 : i1 to i32
    %c0_i32_0 = arith.constant 0 : i32
    %2 = arith.cmpi ne, %1, %c0_i32_0 : i32
    scf.if %2 {
      %cst_10 = arith.constant 0.000000e+00 : f32
      %12 = vector.broadcast %cst_10 : f32 to vector<512x128xf32>
      %c0_11 = arith.constant 0 : index
      %c0_12 = arith.constant 0 : index
      %13 = vector.load %arg7[%c0_11, %c0_12] : memref<512x128xf32, #tpu.memory_space<vmem>>, vector<512x128xf32>
      tpu.vector_store %arg7[%c0_11, %c0_12], %12 {strides = array<i32>} : memref<512x128xf32, #tpu.memory_space<vmem>>, vector<512x128xf32>,
    } else {
    }
    %c0 = arith.constant 0 : index
    %c0_1 = arith.constant 0 : index
    %3 = vector.load %arg7[%c0, %c0_1] : memref<512x128xf32, #tpu.memory_space<vmem>>, vector<512x128xf32>
    %c0_2 = arith.constant 0 : index
    %c0_3 = arith.constant 0 : index
    %4 = vector.load %arg3[%c0_2, %c0_3] : memref<512x128xbf16, #tpu.memory_space<vmem>>, vector<512x128xbf16>
    %c0_4 = arith.constant 0 : index
    %c0_5 = arith.constant 0 : index
    %5 = vector.load %arg4[%c0_4, %c0_5] : memref<128x128xbf16, #tpu.memory_space<vmem>>, vector<128x128xbf16>
    %cst = arith.constant dense<0.000000e+00> : vector<512x128xf32>
    %6 = tpu.matmul %4, %5, %cst {dimension_numbers = #tpu.dot_dimension_numbers<[1], [0], [0], [1], [0, 0, 1, 1], [], []>} : vector<512x128xbf16>, vector<128x128xbf16>, vector<512x128xf32> -> vector<512x128xf32>
    %7 = arith.addf %3, %6 : vector<512x128xf32>
    %c0_6 = arith.constant 0 : index
    %c0_7 = arith.constant 0 : index
    %8 = vector.load %arg7[%c0_6, %c0_7] : memref<512x128xf32, #tpu.memory_space<vmem>>, vector<512x128xf32>
    tpu.vector_store %arg7[%c0_6, %c0_7], %7 {strides = array<i32>} : memref<512x128xf32, #tpu.memory_space<vmem>>, vector<512x128xf32>,
    %c0_i32_8 = arith.constant 0 : i32
    %9 = arith.cmpi eq, %arg2, %c0_i32_8 : i32
    %10 = arith.extui %9 : i1 to i32
    %c0_i32_9 = arith.constant 0 : i32
    %11 = arith.cmpi ne, %10, %c0_i32_9 : i32
    scf.if %11 {
      %c0_10 = arith.constant 0 : index
      %c0_11 = arith.constant 0 : index
      %12 = vector.load %arg7[%c0_10, %c0_11] : memref<512x128xf32, #tpu.memory_space<vmem>>, vector<512x128xf32>
      %c0_12 = arith.constant 0 : index
      %c0_13 = arith.constant 0 : index
      %13 = vector.load %arg5[%c0_12, %c0_13] : memref<1x128xf32, #tpu.memory_space<vmem>>, vector<1x128xf32>
      %14 = vector.broadcast %13 : vector<1x128xf32> to vector<512x128xf32>
      %15 = arith.addf %12, %14 : vector<512x128xf32>
      %cst_14 = arith.constant 1.000000e-01 : f32
      %16 = vector.broadcast %cst_14 : f32 to vector<512x128xf32>
      %17 = arith.mulf %16, %15 : vector<512x128xf32>
      %18 = arith.maximumf %15, %17 : vector<512x128xf32>
      %c0_15 = arith.constant 0 : index
      %c0_16 = arith.constant 0 : index
      %19 = vector.load %arg6[%c0_15, %c0_16] : memref<512x128xf32, #tpu.memory_space<vmem>>, vector<512x128xf32>
      tpu.vector_store %arg6[%c0_15, %c0_16], %18 {strides = array<i32>} : memref<512x128xf32, #tpu.memory_space<vmem>>, vector<512x128xf32>,
    } else {
    }
    return
  }
  func.func @transform_0(%arg0: i32, %arg1: i32, %arg2: i32) -> (i32, i32) {
    %c0_i32 = arith.constant 0 : i32
    return %arg0, %arg2 : i32, i32
  }
  func.func @transform_1(%arg0: i32, %arg1: i32, %arg2: i32) -> (i32, i32) {
    %c0_i32 = arith.constant 0 : i32
    return %arg2, %arg1 : i32, i32
  }
  func.func @transform_2(%arg0: i32, %arg1: i32, %arg2: i32) -> (i32, i32) {
    %c0_i32 = arith.constant 0 : i32
    %c0_i32_0 = arith.constant 0 : i32
    return %c0_i32, %arg1 : i32, i32
  }
  func.func @transform_3(%arg0: i32, %arg1: i32, %arg2: i32) -> (i32, i32) {
    %c0_i32 = arith.constant 0 : i32
    return %arg0, %arg1 : i32, i32
  }
}

</mosaic_0001>

<llo_original>
// kernel: conv_bn_leakyrelu.1
$region0: #{conv_bn_leakyrelu.1}
  #allocation0 [shape = 'u32[]', space=smem, size = 0x4, offset = 0x4, fixed_abs, tag = 'smem constant byte address 0x4 - core index']
  #allocation1 [shape = 'u32[72,128]{1,0:T(1,128)}', space=vmem, size = 0x9000, scoped, tag = 'internal scratch']
  #allocation2 [shape = 'f32[512,128]{1,0:T(8,128)}', space=vmem, size = 0x40000, scoped, tag = 'scratch operand']
  %s0 = inlined_call_operand.vmem [shape: bf16[512,128], index: 0, kind: input, shape index: {}]
  %s1 = inlined_call_operand.vmem [shape: bf16[128,128], index: 1, kind: input, shape index: {}]
  %s2 = inlined_call_operand.vmem [shape: f32[1,128], index: 2, kind: input, shape index: {}]
  %s3 = inlined_call_operand.vmem [shape: f32[512,128], index: 3, kind: output, shape index: {}]
  %s4 = sld [smem:[#allocation0]]
  $region30: #{conv_bn_leakyrelu.1} parent=0
    _
  %s6 = ssub.s32 1, %s4
  %s7 = scalar_select 0, %s6, %s4
  // Predicated region
  $region2: #{conv_bn_leakyrelu.1} parent=0 // pred_check
    _
  $region3: #{conv_bn_leakyrelu.1} parent=0 // pred_check_branch
    %9 = sbr.rel (0) target = $region5
  $region4: #{conv_bn_leakyrelu.1} parent=0 // pred_region
    _
  $region5: #{conv_bn_leakyrelu.1} parent=0 // pred_fallthru
    _
  // Predicated region
  $region6: #{conv_bn_leakyrelu.1} parent=0 // pred_check
    _
  $region7: #{conv_bn_leakyrelu.1} parent=0 // pred_check_branch
    %11 = sbr.rel (0) target = $region9
  $region8: #{conv_bn_leakyrelu.1} parent=0 // pred_region
    _
  $region9: #{conv_bn_leakyrelu.1} parent=0 // pred_fallthru
    _
  // Predicated region
  $region10: #{conv_bn_leakyrelu.1} parent=0 // pred_check
    _
  $region11: #{conv_bn_leakyrelu.1} parent=0 // pred_check_branch
    %13 = sbr.rel (0) target = $region13
  $region12: #{conv_bn_leakyrelu.1} parent=0 // pred_region
    _
  $region13: #{conv_bn_leakyrelu.1} parent=0 // pred_fallthru
    _
  %p14 = scmp.eq.s32.totalorder 0, 0
  // Predicated region
  $region14: #{conv_bn_leakyrelu.1} parent=0 // pred_check
    %p15 = pneg %p14
  $region15: #{conv_bn_leakyrelu.1} parent=0 // pred_check_branch
    %17 = sbr.rel (%p15) target = $region17
  $region16: #{conv_bn_leakyrelu.1} parent=0 // pred_region
    %18 = vst [vmem:[#allocation2] sm:$0xff] 0.0
    %19 = vst [vmem:[#allocation2 + $0x8] sm:$0xff] 0.0
    %20 = vst [vmem:[#allocation2 + $0x10] sm:$0xff] 0.0
    %21 = vst [vmem:[#allocation2 + $0x18] sm:$0xff] 0.0
    %22 = vst [vmem:[#allocation2 + $0x20] sm:$0xff] 0.0
    %23 = vst [vmem:[#allocation2 + $0x28] sm:$0xff] 0.0
    %24 = vst [vmem:[#allocation2 + $0x30] sm:$0xff] 0.0
    %25 = vst [vmem:[#allocation2 + $0x38] sm:$0xff] 0.0
    %26 = vst [vmem:[#allocation2 + $0x40] sm:$0xff] 0.0
    %27 = vst [vmem:[#allocation2 + $0x48] sm:$0xff] 0.0
    %28 = vst [vmem:[#allocation2 + $0x50] sm:$0xff] 0.0
    %29 = vst [vmem:[#allocation2 + $0x58] sm:$0xff] 0.0
    %30 = vst [vmem:[#allocation2 + $0x60] sm:$0xff] 0.0
    %31 = vst [vmem:[#allocation2 + $0x68] sm:$0xff] 0.0
    %32 = vst [vmem:[#allocation2 + $0x70] sm:$0xff] 0.0
    %33 = vst [vmem:[#allocation2 + $0x78] sm:$0xff] 0.0
    %34 = vst [vmem:[#allocation2 + $0x80] sm:$0xff] 0.0
    %35 = vst [vmem:[#allocation2 + $0x88] sm:$0xff] 0.0
    %36 = vst [vmem:[#allocation2 + $0x90] sm:$0xff] 0.0
    %37 = vst [vmem:[#allocation2 + $0x98] sm:$0xff] 0.0
    %38 = vst [vmem:[#allocation2 + $0xa0] sm:$0xff] 0.0
    %39 = vst [vmem:[#allocation2 + $0xa8] sm:$0xff] 0.0
    %40 = vst [vmem:[#allocation2 + $0xb0] sm:$0xff] 0.0
    %41 = vst [vmem:[#allocation2 + $0xb8] sm:$0xff] 0.0
    %42 = vst [vmem:[#allocation2 + $0xc0] sm:$0xff] 0.0
    %43 = vst [vmem:[#allocation2 + $0xc8] sm:$0xff] 0.0
    %44 = vst [vmem:[#allocation2 + $0xd0] sm:$0xff] 0.0
    %45 = vst [vmem:[#allocation2 + $0xd8] sm:$0xff] 0.0
    %46 = vst [vmem:[#allocation2 + $0xe0] sm:$0xff] 0.0
    %47 = vst [vmem:[#allocation2 + $0xe8] sm:$0xff] 0.0
    %48 = vst [vmem:[#allocation2 + $0xf0] sm:$0xff] 0.0
    %49 = vst [vmem:[#allocation2 + $0xf8] sm:$0xff] 0.0
    %50 = vst [vmem:[#allocation2 + $0x100] sm:$0xff] 0.0
    %51 = vst [vmem:[#allocation2 + $0x108] sm:$0xff] 0.0
    %52 = vst [vmem:[#allocation2 + $0x110] sm:$0xff] 0.0
    %53 = vst [vmem:[#allocation2 + $0x118] sm:$0xff] 0.0
    %54 = vst [vmem:[#allocation2 + $0x120] sm:$0xff] 0.0
    %55 = vst [vmem:[#allocation2 + $0x128] sm:$0xff] 0.0
    %56 = vst [vmem:[#allocation2 + $0x130] sm:$0xff] 0.0
    %57 = vst [vmem:[#allocation2 + $0x138] sm:$0xff] 0.0
    %58 = vst [vmem:[#allocation2 + $0x140] sm:$0xff] 0.0
    %59 = vst [vmem:[#allocation2 + $0x148] sm:$0xff] 0.0
    %60 = vst [vmem:[#allocation2 + $0x150] sm:$0xff] 0.0
    %61 = vst [vmem:[#allocation2 + $0x158] sm:$0xff] 0.0
    %62 = vst [vmem:[#allocation2 + $0x160] sm:$0xff] 0.0
    %63 = vst [vmem:[#allocation2 + $0x168] sm:$0xff] 0.0
    %64 = vst [vmem:[#allocation2 + $0x170] sm:$0xff] 0.0
    %65 = vst [vmem:[#allocation2 + $0x178] sm:$0xff] 0.0
    %66 = vst [vmem:[#allocation2 + $0x180] sm:$0xff] 0.0
    %67 = vst [vmem:[#allocation2 + $0x188] sm:$0xff] 0.0
    %68 = vst [vmem:[#allocation2 + $0x190] sm:$0xff] 0.0
    %69 = vst [vmem:[#allocation2 + $0x198] sm:$0xff] 0.0
    %70 = vst [vmem:[#allocation2 + $0x1a0] sm:$0xff] 0.0
    %71 = vst [vmem:[#allocation2 + $0x1a8] sm:$0xff] 0.0
    %72 = vst [vmem:[#allocation2 + $0x1b0] sm:$0xff] 0.0
    %73 = vst [vmem:[#allocation2 + $0x1b8] sm:$0xff] 0.0
    %74 = vst [vmem:[#allocation2 + $0x1c0] sm:$0xff] 0.0
    %75 = vst [vmem:[#allocation2 + $0x1c8] sm:$0xff] 0.0
    %76 = vst [vmem:[#allocation2 + $0x1d0] sm:$0xff] 0.0
    %77 = vst [vmem:[#allocation2 + $0x1d8] sm:$0xff] 0.0
    %78 = vst [vmem:[#allocation2 + $0x1e0] sm:$0xff] 0.0
    %79 = vst [vmem:[#allocation2 + $0x1e8] sm:$0xff] 0.0
    %80 = vst [vmem:[#allocation2 + $0x1f0] sm:$0xff] 0.0
    %81 = vst [vmem:[#allocation2 + $0x1f8] sm:$0xff] 0.0
  $region17: #{conv_bn_leakyrelu.1} parent=0 // pred_fallthru
    _
  %v82 = vld [vmem:[#allocation2] sm:$0xff]
  %v83 = vld [vmem:[#allocation2 + $0x8] sm:$0xff]
  %v84 = vld [vmem:[#allocation2 + $0x10] sm:$0xff]
  %v85 = vld [vmem:[#allocation2 + $0x18] sm:$0xff]
  %v86 = vld [vmem:[#allocation2 + $0x20] sm:$0xff]
  %v87 = vld [vmem:[#allocation2 + $0x28] sm:$0xff]
  %v88 = vld [vmem:[#allocation2 + $0x30] sm:$0xff]
  %v89 = vld [vmem:[#allocation2 + $0x38] sm:$0xff]
  %v90 = vld [vmem:[#allocation2 + $0x40] sm:$0xff]
  %v91 = vld [vmem:[#allocation2 + $0x48] sm:$0xff]
  %v92 = vld [vmem:[#allocation2 + $0x50] sm:$0xff]
  %v93 = vld [vmem:[#allocation2 + $0x58] sm:$0xff]
  %v94 = vld [vmem:[#allocation2 + $0x60] sm:$0xff]
  %v95 = vld [vmem:[#allocation2 + $0x68] sm:$0xff]
  %v96 = vld [vmem:[#allocation2 + $0x70] sm:$0xff]
  %v97 = vld [vmem:[#allocation2 + $0x78] sm:$0xff]
  %v98 = vld [vmem:[#allocation2 + $0x80] sm:$0xff]
  %v99 = vld [vmem:[#allocation2 + $0x88] sm:$0xff]
  %v100 = vld [vmem:[#allocation2 + $0x90] sm:$0xff]
  %v101 = vld [vmem:[#allocation2 + $0x98] sm:$0xff]
  %v102 = vld [vmem:[#allocation2 + $0xa0] sm:$0xff]
  %v103 = vld [vmem:[#allocation2 + $0xa8] sm:$0xff]
  %v104 = vld [vmem:[#allocation2 + $0xb0] sm:$0xff]
  %v105 = vld [vmem:[#allocation2 + $0xb8] sm:$0xff]
  %v106 = vld [vmem:[#allocation2 + $0xc0] sm:$0xff]
  %v107 = vld [vmem:[#allocation2 + $0xc8] sm:$0xff]
  %v108 = vld [vmem:[#allocation2 + $0xd0] sm:$0xff]
  %v109 = vld [vmem:[#allocation2 + $0xd8] sm:$0xff]
  %v110 = vld [vmem:[#allocation2 + $0xe0] sm:$0xff]
  %v111 = vld [vmem:[#allocation2 + $0xe8] sm:$0xff]
  %v112 = vld [vmem:[#allocation2 + $0xf0] sm:$0xff]
  %v113 = vld [vmem:[#allocation2 + $0xf8] sm:$0xff]
  %v114 = vld [vmem:[#allocation2 + $0x100] sm:$0xff]
  %v115 = vld [vmem:[#allocation2 + $0x108] sm:$0xff]
  %v116 = vld [vmem:[#allocation2 + $0x110] sm:$0xff]
  %v117 = vld [vmem:[#allocation2 + $0x118] sm:$0xff]
  %v118 = vld [vmem:[#allocation2 + $0x120] sm:$0xff]
  %v119 = vld [vmem:[#allocation2 + $0x128] sm:$0xff]
  %v120 = vld [vmem:[#allocation2 + $0x130] sm:$0xff]
  %v121 = vld [vmem:[#allocation2 + $0x138] sm:$0xff]
  %v122 = vld [vmem:[#allocation2 + $0x140] sm:$0xff]
  %v123 = vld [vmem:[#allocation2 + $0x148] sm:$0xff]
  %v124 = vld [vmem:[#allocation2 + $0x150] sm:$0xff]
  %v125 = vld [vmem:[#allocation2 + $0x158] sm:$0xff]
  %v126 = vld [vmem:[#allocation2 + $0x160] sm:$0xff]
  %v127 = vld [vmem:[#allocation2 + $0x168] sm:$0xff]
  %v128 = vld [vmem:[#allocation2 + $0x170] sm:$0xff]
  %v129 = vld [vmem:[#allocation2 + $0x178] sm:$0xff]
  %v130 = vld [vmem:[#allocation2 + $0x180] sm:$0xff]
  %v131 = vld [vmem:[#allocation2 + $0x188] sm:$0xff]
  %v132 = vld [vmem:[#allocation2 + $0x190] sm:$0xff]
  %v133 = vld [vmem:[#allocation2 + $0x198] sm:$0xff]
  %v134 = vld [vmem:[#allocation2 + $0x1a0] sm:$0xff]
  %v135 = vld [vmem:[#allocation2 + $0x1a8] sm:$0xff]
  %v136 = vld [vmem:[#allocation2 + $0x1b0] sm:$0xff]
  %v137 = vld [vmem:[#allocation2 + $0x1b8] sm:$0xff]
  %v138 = vld [vmem:[#allocation2 + $0x1c0] sm:$0xff]
  %v139 = vld [vmem:[#allocation2 + $0x1c8] sm:$0xff]
  %v140 = vld [vmem:[#allocation2 + $0x1d0] sm:$0xff]
  %v141 = vld [vmem:[#allocation2 + $0x1d8] sm:$0xff]
  %v142 = vld [vmem:[#allocation2 + $0x1e0] sm:$0xff]
  %v143 = vld [vmem:[#allocation2 + $0x1e8] sm:$0xff]
  %v144 = vld [vmem:[#allocation2 + $0x1f0] sm:$0xff]
  %v145 = vld [vmem:[#allocation2 + $0x1f8] sm:$0xff]
  %v146 = vld [vmem:[%s0] sm:$0xf]
  %v147 = vld [vmem:[%s0 + $0x4] sm:$0xf]
  %v148 = vld [vmem:[%s0 + $0x8] sm:$0xf]
  %v149 = vld [vmem:[%s0 + $0xc] sm:$0xf]
  %v150 = vld [vmem:[%s0 + $0x10] sm:$0xf]
  %v151 = vld [vmem:[%s0 + $0x14] sm:$0xf]
  %v152 = vld [vmem:[%s0 + $0x18] sm:$0xf]
  %v153 = vld [vmem:[%s0 + $0x1c] sm:$0xf]
  %v154 = vld [vmem:[%s0 + $0x20] sm:$0xf]
  %v155 = vld [vmem:[%s0 + $0x24] sm:$0xf]
  %v156 = vld [vmem:[%s0 + $0x28] sm:$0xf]
  %v157 = vld [vmem:[%s0 + $0x2c] sm:$0xf]
  %v158 = vld [vmem:[%s0 + $0x30] sm:$0xf]
  %v159 = vld [vmem:[%s0 + $0x34] sm:$0xf]
  %v160 = vld [vmem:[%s0 + $0x38] sm:$0xf]
  %v161 = vld [vmem:[%s0 + $0x3c] sm:$0xf]
  %v162 = vld [vmem:[%s0 + $0x40] sm:$0xf]
  %v163 = vld [vmem:[%s0 + $0x44] sm:$0xf]
  %v164 = vld [vmem:[%s0 + $0x48] sm:$0xf]
  %v165 = vld [vmem:[%s0 + $0x4c] sm:$0xf]
  %v166 = vld [vmem:[%s0 + $0x50] sm:$0xf]
  %v167 = vld [vmem:[%s0 + $0x54] sm:$0xf]
  %v168 = vld [vmem:[%s0 + $0x58] sm:$0xf]
  %v169 = vld [vmem:[%s0 + $0x5c] sm:$0xf]
  %v170 = vld [vmem:[%s0 + $0x60] sm:$0xf]
  %v171 = vld [vmem:[%s0 + $0x64] sm:$0xf]
  %v172 = vld [vmem:[%s0 + $0x68] sm:$0xf]
  %v173 = vld [vmem:[%s0 + $0x6c] sm:$0xf]
  %v174 = vld [vmem:[%s0 + $0x70] sm:$0xf]
  %v175 = vld [vmem:[%s0 + $0x74] sm:$0xf]
  %v176 = vld [vmem:[%s0 + $0x78] sm:$0xf]
  %v177 = vld [vmem:[%s0 + $0x7c] sm:$0xf]
  %v178 = vld [vmem:[%s0 + $0x80] sm:$0xf]
  %v179 = vld [vmem:[%s0 + $0x84] sm:$0xf]
  %v180 = vld [vmem:[%s0 + $0x88] sm:$0xf]
  %v181 = vld [vmem:[%s0 + $0x8c] sm:$0xf]
  %v182 = vld [vmem:[%s0 + $0x90] sm:$0xf]
  %v183 = vld [vmem:[%s0 + $0x94] sm:$0xf]
  %v184 = vld [vmem:[%s0 + $0x98] sm:$0xf]
  %v185 = vld [vmem:[%s0 + $0x9c] sm:$0xf]
  %v186 = vld [vmem:[%s0 + $0xa0] sm:$0xf]
  %v187 = vld [vmem:[%s0 + $0xa4] sm:$0xf]
  %v188 = vld [vmem:[%s0 + $0xa8] sm:$0xf]
  %v189 = vld [vmem:[%s0 + $0xac] sm:$0xf]
  %v190 = vld [vmem:[%s0 + $0xb0] sm:$0xf]
  %v191 = vld [vmem:[%s0 + $0xb4] sm:$0xf]
  %v192 = vld [vmem:[%s0 + $0xb8] sm:$0xf]
  %v193 = vld [vmem:[%s0 + $0xbc] sm:$0xf]
  %v194 = vld [vmem:[%s0 + $0xc0] sm:$0xf]
  %v195 = vld [vmem:[%s0 + $0xc4] sm:$0xf]
  %v196 = vld [vmem:[%s0 + $0xc8] sm:$0xf]
  %v197 = vld [vmem:[%s0 + $0xcc] sm:$0xf]
  %v198 = vld [vmem:[%s0 + $0xd0] sm:$0xf]
  %v199 = vld [vmem:[%s0 + $0xd4] sm:$0xf]
  %v200 = vld [vmem:[%s0 + $0xd8] sm:$0xf]
  %v201 = vld [vmem:[%s0 + $0xdc] sm:$0xf]
  %v202 = vld [vmem:[%s0 + $0xe0] sm:$0xf]
  %v203 = vld [vmem:[%s0 + $0xe4] sm:$0xf]
  %v204 = vld [vmem:[%s0 + $0xe8] sm:$0xf]
  %v205 = vld [vmem:[%s0 + $0xec] sm:$0xf]
  %v206 = vld [vmem:[%s0 + $0xf0] sm:$0xf]
  %v207 = vld [vmem:[%s0 + $0xf4] sm:$0xf]
  %v208 = vld [vmem:[%s0 + $0xf8] sm:$0xf]
  %v209 = vld [vmem:[%s0 + $0xfc] sm:$0xf]
  %v210 = vld [vmem:[%s1] sm:$0xf]
  %v211 = vld [vmem:[%s1 + $0x4] sm:$0xf]
  %v212 = vld [vmem:[%s1 + $0x8] sm:$0xf]
  %v213 = vld [vmem:[%s1 + $0xc] sm:$0xf]
  %v214 = vld [vmem:[%s1 + $0x10] sm:$0xf]
  %v215 = vld [vmem:[%s1 + $0x14] sm:$0xf]
  %v216 = vld [vmem:[%s1 + $0x18] sm:$0xf]
  %v217 = vld [vmem:[%s1 + $0x1c] sm:$0xf]
  %v218 = vld [vmem:[%s1 + $0x20] sm:$0xf]
  %v219 = vld [vmem:[%s1 + $0x24] sm:$0xf]
  %v220 = vld [vmem:[%s1 + $0x28] sm:$0xf]
  %v221 = vld [vmem:[%s1 + $0x2c] sm:$0xf]
  %v222 = vld [vmem:[%s1 + $0x30] sm:$0xf]
  %v223 = vld [vmem:[%s1 + $0x34] sm:$0xf]
  %v224 = vld [vmem:[%s1 + $0x38] sm:$0xf]
  %v225 = vld [vmem:[%s1 + $0x3c] sm:$0xf]
  %v290 = vunpack.c.l.b16 %v146
  %v291 = vunpack.c.l.b16 %v147
  %v292 = vunpack.c.l.b16 %v148
  %v293 = vunpack.c.l.b16 %v149
  %v294 = vunpack.c.l.b16 %v150
  %v295 = vunpack.c.l.b16 %v151
  %v296 = vunpack.c.l.b16 %v152
  %v297 = vunpack.c.l.b16 %v153
  %v298 = vunpack.c.l.b16 %v154
  %v299 = vunpack.c.l.b16 %v155
  %v300 = vunpack.c.l.b16 %v156
  %v301 = vunpack.c.l.b16 %v157
  %v302 = vunpack.c.l.b16 %v158
  %v303 = vunpack.c.l.b16 %v159
  %v304 = vunpack.c.l.b16 %v160
  %v305 = vunpack.c.l.b16 %v161
  %v306 = vunpack.c.l.b16 %v162
  %v307 = vunpack.c.l.b16 %v163
  %v308 = vunpack.c.l.b16 %v164
  %v309 = vunpack.c.l.b16 %v165
  %v310 = vunpack.c.l.b16 %v166
  %v311 = vunpack.c.l.b16 %v167
  %v312 = vunpack.c.l.b16 %v168
  %v313 = vunpack.c.l.b16 %v169
  %v314 = vunpack.c.l.b16 %v170
  %v315 = vunpack.c.l.b16 %v171
  %v316 = vunpack.c.l.b16 %v172
  %v317 = vunpack.c.l.b16 %v173
  %v318 = vunpack.c.l.b16 %v174
  %v319 = vunpack.c.l.b16 %v175
  %v320 = vunpack.c.l.b16 %v176
  %v321 = vunpack.c.l.b16 %v177
  %v322 = vunpack.c.l.b16 %v178
  %v323 = vunpack.c.l.b16 %v179
  %v324 = vunpack.c.l.b16 %v180
  %v325 = vunpack.c.l.b16 %v181
  %v326 = vunpack.c.l.b16 %v182
  %v327 = vunpack.c.l.b16 %v183
  %v328 = vunpack.c.l.b16 %v184
  %v329 = vunpack.c.l.b16 %v185
  %v330 = vunpack.c.l.b16 %v186
  %v331 = vunpack.c.l.b16 %v187
  %v332 = vunpack.c.l.b16 %v188
  %v333 = vunpack.c.l.b16 %v189
  %v334 = vunpack.c.l.b16 %v190
  %v335 = vunpack.c.l.b16 %v191
  %v336 = vunpack.c.l.b16 %v192
  %v337 = vunpack.c.l.b16 %v193
  %v338 = vunpack.c.l.b16 %v194
  %v339 = vunpack.c.l.b16 %v195
  %v340 = vunpack.c.l.b16 %v196
  %v341 = vunpack.c.l.b16 %v197
  %v342 = vunpack.c.l.b16 %v198
  %v343 = vunpack.c.l.b16 %v199
  %v344 = vunpack.c.l.b16 %v200
  %v345 = vunpack.c.l.b16 %v201
  %v346 = vunpack.c.l.b16 %v202
  %v347 = vunpack.c.l.b16 %v203
  %v348 = vunpack.c.l.b16 %v204
  %v349 = vunpack.c.l.b16 %v205
  %v350 = vunpack.c.l.b16 %v206
  %v351 = vunpack.c.l.b16 %v207
  %v352 = vunpack.c.l.b16 %v208
  %v353 = vunpack.c.l.b16 %v209
  %v354 = vpack.c.b16 %v291, %v290
  %v355 = vpack.c.b16 %v293, %v292
  %v356 = vpack.c.b16 %v295, %v294
  %v357 = vpack.c.b16 %v297, %v296
  %v358 = vpack.c.b16 %v299, %v298
  %v359 = vpack.c.b16 %v301, %v300
  %v360 = vpack.c.b16 %v303, %v302
  %v361 = vpack.c.b16 %v305, %v304
  %v362 = vpack.c.b16 %v307, %v306
  %v363 = vpack.c.b16 %v309, %v308
  %v364 = vpack.c.b16 %v311, %v310
  %v365 = vpack.c.b16 %v313, %v312
  %v366 = vpack.c.b16 %v315, %v314
  %v367 = vpack.c.b16 %v317, %v316
  %v368 = vpack.c.b16 %v319, %v318
  %v369 = vpack.c.b16 %v321, %v320
  %v370 = vpack.c.b16 %v323, %v322
  %v371 = vpack.c.b16 %v325, %v324
  %v372 = vpack.c.b16 %v327, %v326
  %v373 = vpack.c.b16 %v329, %v328
  %v374 = vpack.c.b16 %v331, %v330
  %v375 = vpack.c.b16 %v333, %v332
  %v376 = vpack.c.b16 %v335, %v334
  %v377 = vpack.c.b16 %v337, %v336
  %v378 = vpack.c.b16 %v339, %v338
  %v379 = vpack.c.b16 %v341, %v340
  %v380 = vpack.c.b16 %v343, %v342
  %v381 = vpack.c.b16 %v345, %v344
  %v382 = vpack.c.b16 %v347, %v346
  %v383 = vpack.c.b16 %v349, %v348
  %v384 = vpack.c.b16 %v351, %v350
  %v385 = vpack.c.b16 %v353, %v352
  %v434 = vunpack.c.l.b16 %v210
  %v435 = vunpack.c.l.b16 %v211
  %v436 = vunpack.c.l.b16 %v212
  %v437 = vunpack.c.l.b16 %v213
  %v438 = vunpack.c.l.b16 %v214
  %v439 = vunpack.c.l.b16 %v215
  %v440 = vunpack.c.l.b16 %v216
  %v441 = vunpack.c.l.b16 %v217
  %v442 = vunpack.c.l.b16 %v218
  %v443 = vunpack.c.l.b16 %v219
  %v444 = vunpack.c.l.b16 %v220
  %v445 = vunpack.c.l.b16 %v221
  %v446 = vunpack.c.l.b16 %v222
  %v447 = vunpack.c.l.b16 %v223
  %v448 = vunpack.c.l.b16 %v224
  %v449 = vunpack.c.l.b16 %v225
  %v450 = vpack.c.b16 %v435, %v434
  %v451 = vpack.c.b16 %v437, %v436
  %v452 = vpack.c.b16 %v439, %v438
  %v453 = vpack.c.b16 %v441, %v440
  %v454 = vpack.c.b16 %v443, %v442
  %v455 = vpack.c.b16 %v445, %v444
  %v456 = vpack.c.b16 %v447, %v446
  %v457 = vpack.c.b16 %v449, %v448
  %466 = vmatpush.bf16.msra.mxu0 %v457
  %467 = vmatpush.bf16.msra.mxu0 %v456
  %468 = vmatpush.bf16.msra.mxu0 %v455
  %469 = vmatpush.bf16.msra.mxu0 %v454
  %470 = vmatpush.bf16.msra.mxu0 %v453
  %471 = vmatpush.bf16.msra.mxu0 %v452
  %472 = vmatpush.bf16.msra.mxu0 %v451
  %473 = vmatpush.bf16.msra.mxu0 %v450
  %474 = vmatmul.bf16.gmra.mxu0 %v354
  %v475 = vpop.f32.mrf.mxu0
  %v476 = vadd.f32 0.0, %v475
  %v477 = vpop.f32.mrf.mxu0
  %v478 = vadd.f32 0.0, %v477
  %479 = vmatmul.bf16.gmra.mxu0 %v355
  %v480 = vpop.f32.mrf.mxu0
  %v481 = vadd.f32 0.0, %v480
  %v482 = vpop.f32.mrf.mxu0
  %v483 = vadd.f32 0.0, %v482
  %484 = vmatmul.bf16.gmra.mxu0 %v356
  %v485 = vpop.f32.mrf.mxu0
  %v486 = vadd.f32 0.0, %v485
  %v487 = vpop.f32.mrf.mxu0
  %v488 = vadd.f32 0.0, %v487
  %489 = vmatmul.bf16.gmra.mxu0 %v357
  %v490 = vpop.f32.mrf.mxu0
  %v491 = vadd.f32 0.0, %v490
  %v492 = vpop.f32.mrf.mxu0
  %v493 = vadd.f32 0.0, %v492
  %494 = vmatmul.bf16.gmra.mxu0 %v358
  %v495 = vpop.f32.mrf.mxu0
  %v496 = vadd.f32 0.0, %v495
  %v497 = vpop.f32.mrf.mxu0
  %v498 = vadd.f32 0.0, %v497
  %499 = vmatmul.bf16.gmra.mxu0 %v359
  %v500 = vpop.f32.mrf.mxu0
  %v501 = vadd.f32 0.0, %v500
  %v502 = vpop.f32.mrf.mxu0
  %v503 = vadd.f32 0.0, %v502
  %504 = vmatmul.bf16.gmra.mxu0 %v360
  %v505 = vpop.f32.mrf.mxu0
  %v506 = vadd.f32 0.0, %v505
  %v507 = vpop.f32.mrf.mxu0
  %v508 = vadd.f32 0.0, %v507
  %509 = vmatmul.bf16.gmra.mxu0 %v361
  %v510 = vpop.f32.mrf.mxu0
  %v511 = vadd.f32 0.0, %v510
  %v512 = vpop.f32.mrf.mxu0
  %v513 = vadd.f32 0.0, %v512
  %514 = vmatmul.bf16.gmra.mxu0 %v362
  %v515 = vpop.f32.mrf.mxu0
  %v516 = vadd.f32 0.0, %v515
  %v517 = vpop.f32.mrf.mxu0
  %v518 = vadd.f32 0.0, %v517
  %519 = vmatmul.bf16.gmra.mxu0 %v363
  %v520 = vpop.f32.mrf.mxu0
  %v521 = vadd.f32 0.0, %v520
  %v522 = vpop.f32.mrf.mxu0
  %v523 = vadd.f32 0.0, %v522
  %524 = vmatmul.bf16.gmra.mxu0 %v364
  %v525 = vpop.f32.mrf.mxu0
  %v526 = vadd.f32 0.0, %v525
  %v527 = vpop.f32.mrf.mxu0
  %v528 = vadd.f32 0.0, %v527
  %529 = vmatmul.bf16.gmra.mxu0 %v365
  %v530 = vpop.f32.mrf.mxu0
  %v531 = vadd.f32 0.0, %v530
  %v532 = vpop.f32.mrf.mxu0
  %v533 = vadd.f32 0.0, %v532
  %534 = vmatmul.bf16.gmra.mxu0 %v366
  %v535 = vpop.f32.mrf.mxu0
  %v536 = vadd.f32 0.0, %v535
  %v537 = vpop.f32.mrf.mxu0
  %v538 = vadd.f32 0.0, %v537
  %539 = vmatmul.bf16.gmra.mxu0 %v367
  %v540 = vpop.f32.mrf.mxu0
  %v541 = vadd.f32 0.0, %v540
  %v542 = vpop.f32.mrf.mxu0
  %v543 = vadd.f32 0.0, %v542
  %544 = vmatmul.bf16.gmra.mxu0 %v368
  %v545 = vpop.f32.mrf.mxu0
  %v546 = vadd.f32 0.0, %v545
  %v547 = vpop.f32.mrf.mxu0
  %v548 = vadd.f32 0.0, %v547
  %549 = vmatmul.bf16.gmra.mxu0 %v369
  %v550 = vpop.f32.mrf.mxu0
  %v551 = vadd.f32 0.0, %v550
  %v552 = vpop.f32.mrf.mxu0
  %v553 = vadd.f32 0.0, %v552
  %554 = vmatmul.bf16.gmra.mxu0 %v370
  %v555 = vpop.f32.mrf.mxu0
  %v556 = vadd.f32 0.0, %v555
  %v557 = vpop.f32.mrf.mxu0
  %v558 = vadd.f32 0.0, %v557
  %559 = vmatmul.bf16.gmra.mxu0 %v371
  %v560 = vpop.f32.mrf.mxu0
  %v561 = vadd.f32 0.0, %v560
  %v562 = vpop.f32.mrf.mxu0
  %v563 = vadd.f32 0.0, %v562
  %564 = vmatmul.bf16.gmra.mxu0 %v372
  %v565 = vpop.f32.mrf.mxu0
  %v566 = vadd.f32 0.0, %v565
  %v567 = vpop.f32.mrf.mxu0
  %v568 = vadd.f32 0.0, %v567
  %569 = vmatmul.bf16.gmra.mxu0 %v373
  %v570 = vpop.f32.mrf.mxu0
  %v571 = vadd.f32 0.0, %v570
  %v572 = vpop.f32.mrf.mxu0
  %v573 = vadd.f32 0.0, %v572
  %574 = vmatmul.bf16.gmra.mxu0 %v374
  %v575 = vpop.f32.mrf.mxu0
  %v576 = vadd.f32 0.0, %v575
  %v577 = vpop.f32.mrf.mxu0
  %v578 = vadd.f32 0.0, %v577
  %579 = vmatmul.bf16.gmra.mxu0 %v375
  %v580 = vpop.f32.mrf.mxu0
  %v581 = vadd.f32 0.0, %v580
  %v582 = vpop.f32.mrf.mxu0
  %v583 = vadd.f32 0.0, %v582
  %584 = vmatmul.bf16.gmra.mxu0 %v376
  %v585 = vpop.f32.mrf.mxu0
  %v586 = vadd.f32 0.0, %v585
  %v587 = vpop.f32.mrf.mxu0
  %v588 = vadd.f32 0.0, %v587
  %589 = vmatmul.bf16.gmra.mxu0 %v377
  %v590 = vpop.f32.mrf.mxu0
  %v591 = vadd.f32 0.0, %v590
  %v592 = vpop.f32.mrf.mxu0
  %v593 = vadd.f32 0.0, %v592
  %594 = vmatmul.bf16.gmra.mxu0 %v378
  %v595 = vpop.f32.mrf.mxu0
  %v596 = vadd.f32 0.0, %v595
  %v597 = vpop.f32.mrf.mxu0
  %v598 = vadd.f32 0.0, %v597
  %599 = vmatmul.bf16.gmra.mxu0 %v379
  %v600 = vpop.f32.mrf.mxu0
  %v601 = vadd.f32 0.0, %v600
  %v602 = vpop.f32.mrf.mxu0
  %v603 = vadd.f32 0.0, %v602
  %604 = vmatmul.bf16.gmra.mxu0 %v380
  %v605 = vpop.f32.mrf.mxu0
  %v606 = vadd.f32 0.0, %v605
  %v607 = vpop.f32.mrf.mxu0
  %v608 = vadd.f32 0.0, %v607
  %609 = vmatmul.bf16.gmra.mxu0 %v381
  %v610 = vpop.f32.mrf.mxu0
  %v611 = vadd.f32 0.0, %v610
  %v612 = vpop.f32.mrf.mxu0
  %v613 = vadd.f32 0.0, %v612
  %614 = vmatmul.bf16.gmra.mxu0 %v382
  %v615 = vpop.f32.mrf.mxu0
  %v616 = vadd.f32 0.0, %v615
  %v617 = vpop.f32.mrf.mxu0
  %v618 = vadd.f32 0.0, %v617
  %619 = vmatmul.bf16.gmra.mxu0 %v383
  %v620 = vpop.f32.mrf.mxu0
  %v621 = vadd.f32 0.0, %v620
  %v622 = vpop.f32.mrf.mxu0
  %v623 = vadd.f32 0.0, %v622
  %624 = vmatmul.bf16.gmra.mxu0 %v384
  %v625 = vpop.f32.mrf.mxu0
  %v626 = vadd.f32 0.0, %v625
  %v627 = vpop.f32.mrf.mxu0
  %v628 = vadd.f32 0.0, %v627
  %629 = vmatmul.bf16.gmra.mxu0 %v385
  %v630 = vpop.f32.mrf.mxu0
  %v631 = vadd.f32 0.0, %v630
  %v632 = vpop.f32.mrf.mxu0
  %v633 = vadd.f32 0.0, %v632
  %634 = vdwg.mxu0
  %v635 = vadd.f32 %v82, %v476
  %v636 = vadd.f32 %v83, %v478
  %v637 = vadd.f32 %v84, %v481
  %v638 = vadd.f32 %v85, %v483
  %v639 = vadd.f32 %v86, %v486
  %v640 = vadd.f32 %v87, %v488
  %v641 = vadd.f32 %v88, %v491
  %v642 = vadd.f32 %v89, %v493
  %v643 = vadd.f32 %v90, %v496
  %v644 = vadd.f32 %v91, %v498
  %v645 = vadd.f32 %v92, %v501
  %v646 = vadd.f32 %v93, %v503
  %v647 = vadd.f32 %v94, %v506
  %v648 = vadd.f32 %v95, %v508
  %v649 = vadd.f32 %v96, %v511
  %v650 = vadd.f32 %v97, %v513
  %v651 = vadd.f32 %v98, %v516
  %v652 = vadd.f32 %v99, %v518
  %v653 = vadd.f32 %v100, %v521
  %v654 = vadd.f32 %v101, %v523
  %v655 = vadd.f32 %v102, %v526
  %v656 = vadd.f32 %v103, %v528
  %v657 = vadd.f32 %v104, %v531
  %v658 = vadd.f32 %v105, %v533
  %v659 = vadd.f32 %v106, %v536
  %v660 = vadd.f32 %v107, %v538
  %v661 = vadd.f32 %v108, %v541
  %v662 = vadd.f32 %v109, %v543
  %v663 = vadd.f32 %v110, %v546
  %v664 = vadd.f32 %v111, %v548
  %v665 = vadd.f32 %v112, %v551
  %v666 = vadd.f32 %v113, %v553
  %v667 = vadd.f32 %v114, %v556
  %v668 = vadd.f32 %v115, %v558
  %v669 = vadd.f32 %v116, %v561
  %v670 = vadd.f32 %v117, %v563
  %v671 = vadd.f32 %v118, %v566
  %v672 = vadd.f32 %v119, %v568
  %v673 = vadd.f32 %v120, %v571
  %v674 = vadd.f32 %v121, %v573
  %v675 = vadd.f32 %v122, %v576
  %v676 = vadd.f32 %v123, %v578
  %v677 = vadd.f32 %v124, %v581
  %v678 = vadd.f32 %v125, %v583
  %v679 = vadd.f32 %v126, %v586
  %v680 = vadd.f32 %v127, %v588
  %v681 = vadd.f32 %v128, %v591
  %v682 = vadd.f32 %v129, %v593
  %v683 = vadd.f32 %v130, %v596
  %v684 = vadd.f32 %v131, %v598
  %v685 = vadd.f32 %v132, %v601
  %v686 = vadd.f32 %v133, %v603
  %v687 = vadd.f32 %v134, %v606
  %v688 = vadd.f32 %v135, %v608
  %v689 = vadd.f32 %v136, %v611
  %v690 = vadd.f32 %v137, %v613
  %v691 = vadd.f32 %v138, %v616
  %v692 = vadd.f32 %v139, %v618
  %v693 = vadd.f32 %v140, %v621
  %v694 = vadd.f32 %v141, %v623
  %v695 = vadd.f32 %v142, %v626
  %v696 = vadd.f32 %v143, %v628
  %v697 = vadd.f32 %v144, %v631
  %v698 = vadd.f32 %v145, %v633
  %699 = vst [vmem:[#allocation2] sm:$0xff] %v635
  %700 = vst [vmem:[#allocation2 + $0x8] sm:$0xff] %v636
  %701 = vst [vmem:[#allocation2 + $0x10] sm:$0xff] %v637
  %702 = vst [vmem:[#allocation2 + $0x18] sm:$0xff] %v638
  %703 = vst [vmem:[#allocation2 + $0x20] sm:$0xff] %v639
  %704 = vst [vmem:[#allocation2 + $0x28] sm:$0xff] %v640
  %705 = vst [vmem:[#allocation2 + $0x30] sm:$0xff] %v641
  %706 = vst [vmem:[#allocation2 + $0x38] sm:$0xff] %v642
  %707 = vst [vmem:[#allocation2 + $0x40] sm:$0xff] %v643
  %708 = vst [vmem:[#allocation2 + $0x48] sm:$0xff] %v644
  %709 = vst [vmem:[#allocation2 + $0x50] sm:$0xff] %v645
  %710 = vst [vmem:[#allocation2 + $0x58] sm:$0xff] %v646
  %711 = vst [vmem:[#allocation2 + $0x60] sm:$0xff] %v647
  %712 = vst [vmem:[#allocation2 + $0x68] sm:$0xff] %v648
  %713 = vst [vmem:[#allocation2 + $0x70] sm:$0xff] %v649
  %714 = vst [vmem:[#allocation2 + $0x78] sm:$0xff] %v650
  %715 = vst [vmem:[#allocation2 + $0x80] sm:$0xff] %v651
  %716 = vst [vmem:[#allocation2 + $0x88] sm:$0xff] %v652
  %717 = vst [vmem:[#allocation2 + $0x90] sm:$0xff] %v653
  %718 = vst [vmem:[#allocation2 + $0x98] sm:$0xff] %v654
  %719 = vst [vmem:[#allocation2 + $0xa0] sm:$0xff] %v655
  %720 = vst [vmem:[#allocation2 + $0xa8] sm:$0xff] %v656
  %721 = vst [vmem:[#allocation2 + $0xb0] sm:$0xff] %v657
  %722 = vst [vmem:[#allocation2 + $0xb8] sm:$0xff] %v658
  %723 = vst [vmem:[#allocation2 + $0xc0] sm:$0xff] %v659
  %724 = vst [vmem:[#allocation2 + $0xc8] sm:$0xff] %v660
  %725 = vst [vmem:[#allocation2 + $0xd0] sm:$0xff] %v661
  %726 = vst [vmem:[#allocation2 + $0xd8] sm:$0xff] %v662
  %727 = vst [vmem:[#allocation2 + $0xe0] sm:$0xff] %v663
  %728 = vst [vmem:[#allocation2 + $0xe8] sm:$0xff] %v664
  %729 = vst [vmem:[#allocation2 + $0xf0] sm:$0xff] %v665
  %730 = vst [vmem:[#allocation2 + $0xf8] sm:$0xff] %v666
  %731 = vst [vmem:[#allocation2 + $0x100] sm:$0xff] %v667
  %732 = vst [vmem:[#allocation2 + $0x108] sm:$0xff] %v668
  %733 = vst [vmem:[#allocation2 + $0x110] sm:$0xff] %v669
  %734 = vst [vmem:[#allocation2 + $0x118] sm:$0xff] %v670
  %735 = vst [vmem:[#allocation2 + $0x120] sm:$0xff] %v671
  %736 = vst [vmem:[#allocation2 + $0x128] sm:$0xff] %v672
  %737 = vst [vmem:[#allocation2 + $0x130] sm:$0xff] %v673
  %738 = vst [vmem:[#allocation2 + $0x138] sm:$0xff] %v674
  %739 = vst [vmem:[#allocation2 + $0x140] sm:$0xff] %v675
  %740 = vst [vmem:[#allocation2 + $0x148] sm:$0xff] %v676
  %741 = vst [vmem:[#allocation2 + $0x150] sm:$0xff] %v677
  %742 = vst [vmem:[#allocation2 + $0x158] sm:$0xff] %v678
  %743 = vst [vmem:[#allocation2 + $0x160] sm:$0xff] %v679
  %744 = vst [vmem:[#allocation2 + $0x168] sm:$0xff] %v680
  %745 = vst [vmem:[#allocation2 + $0x170] sm:$0xff] %v681
  %746 = vst [vmem:[#allocation2 + $0x178] sm:$0xff] %v682
  %747 = vst [vmem:[#allocation2 + $0x180] sm:$0xff] %v683
  %748 = vst [vmem:[#allocation2 + $0x188] sm:$0xff] %v684
  %749 = vst [vmem:[#allocation2 + $0x190] sm:$0xff] %v685
  %750 = vst [vmem:[#allocation2 + $0x198] sm:$0xff] %v686
  %751 = vst [vmem:[#allocation2 + $0x1a0] sm:$0xff] %v687
  %752 = vst [vmem:[#allocation2 + $0x1a8] sm:$0xff] %v688
  %753 = vst [vmem:[#allocation2 + $0x1b0] sm:$0xff] %v689
  %754 = vst [vmem:[#allocation2 + $0x1b8] sm:$0xff] %v690
  %755 = vst [vmem:[#allocation2 + $0x1c0] sm:$0xff] %v691
  %756 = vst [vmem:[#allocation2 + $0x1c8] sm:$0xff] %v692
  %757 = vst [vmem:[#allocation2 + $0x1d0] sm:$0xff] %v693
  %758 = vst [vmem:[#allocation2 + $0x1d8] sm:$0xff] %v694
  %759 = vst [vmem:[#allocation2 + $0x1e0] sm:$0xff] %v695
  %760 = vst [vmem:[#allocation2 + $0x1e8] sm:$0xff] %v696
  %761 = vst [vmem:[#allocation2 + $0x1f0] sm:$0xff] %v697
  %762 = vst [vmem:[#allocation2 + $0x1f8] sm:$0xff] %v698
  // Predicated region
  $region18: #{conv_bn_leakyrelu.1} parent=0 // pred_check
    %p763 = pneg %p14
  $region19: #{conv_bn_leakyrelu.1} parent=0 // pred_check_branch
    %765 = sbr.rel (%p763) target = $region21
  $region20: #{conv_bn_leakyrelu.1} parent=0 // pred_region
    %v766 = vld [vmem:[#allocation2] sm:$0xff]
    %v767 = vld [vmem:[#allocation2 + $0x8] sm:$0xff]
    %v768 = vld [vmem:[#allocation2 + $0x10] sm:$0xff]
    %v769 = vld [vmem:[#allocation2 + $0x18] sm:$0xff]
    %v770 = vld [vmem:[#allocation2 + $0x20] sm:$0xff]
    %v771 = vld [vmem:[#allocation2 + $0x28] sm:$0xff]
    %v772 = vld [vmem:[#allocation2 + $0x30] sm:$0xff]
    %v773 = vld [vmem:[#allocation2 + $0x38] sm:$0xff]
    %v774 = vld [vmem:[#allocation2 + $0x40] sm:$0xff]
    %v775 = vld [vmem:[#allocation2 + $0x48] sm:$0xff]
    %v776 = vld [vmem:[#allocation2 + $0x50] sm:$0xff]
    %v777 = vld [vmem:[#allocation2 + $0x58] sm:$0xff]
    %v778 = vld [vmem:[#allocation2 + $0x60] sm:$0xff]
    %v779 = vld [vmem:[#allocation2 + $0x68] sm:$0xff]
    %v780 = vld [vmem:[#allocation2 + $0x70] sm:$0xff]
    %v781 = vld [vmem:[#allocation2 + $0x78] sm:$0xff]
    %v782 = vld [vmem:[#allocation2 + $0x80] sm:$0xff]
    %v783 = vld [vmem:[#allocation2 + $0x88] sm:$0xff]
    %v784 = vld [vmem:[#allocation2 + $0x90] sm:$0xff]
    %v785 = vld [vmem:[#allocation2 + $0x98] sm:$0xff]
    %v786 = vld [vmem:[#allocation2 + $0xa0] sm:$0xff]
    %v787 = vld [vmem:[#allocation2 + $0xa8] sm:$0xff]
    %v788 = vld [vmem:[#allocation2 + $0xb0] sm:$0xff]
    %v789 = vld [vmem:[#allocation2 + $0xb8] sm:$0xff]
    %v790 = vld [vmem:[#allocation2 + $0xc0] sm:$0xff]
    %v791 = vld [vmem:[#allocation2 + $0xc8] sm:$0xff]
    %v792 = vld [vmem:[#allocation2 + $0xd0] sm:$0xff]
    %v793 = vld [vmem:[#allocation2 + $0xd8] sm:$0xff]
    %v794 = vld [vmem:[#allocation2 + $0xe0] sm:$0xff]
    %v795 = vld [vmem:[#allocation2 + $0xe8] sm:$0xff]
    %v796 = vld [vmem:[#allocation2 + $0xf0] sm:$0xff]
    %v797 = vld [vmem:[#allocation2 + $0xf8] sm:$0xff]
    %v798 = vld [vmem:[#allocation2 + $0x100] sm:$0xff]
    %v799 = vld [vmem:[#allocation2 + $0x108] sm:$0xff]
    %v800 = vld [vmem:[#allocation2 + $0x110] sm:$0xff]
    %v801 = vld [vmem:[#allocation2 + $0x118] sm:$0xff]
    %v802 = vld [vmem:[#allocation2 + $0x120] sm:$0xff]
    %v803 = vld [vmem:[#allocation2 + $0x128] sm:$0xff]
    %v804 = vld [vmem:[#allocation2 + $0x130] sm:$0xff]
    %v805 = vld [vmem:[#allocation2 + $0x138] sm:$0xff]
    %v806 = vld [vmem:[#allocation2 + $0x140] sm:$0xff]
    %v807 = vld [vmem:[#allocation2 + $0x148] sm:$0xff]
    %v808 = vld [vmem:[#allocation2 + $0x150] sm:$0xff]
    %v809 = vld [vmem:[#allocation2 + $0x158] sm:$0xff]
    %v810 = vld [vmem:[#allocation2 + $0x160] sm:$0xff]
    %v811 = vld [vmem:[#allocation2 + $0x168] sm:$0xff]
    %v812 = vld [vmem:[#allocation2 + $0x170] sm:$0xff]
    %v813 = vld [vmem:[#allocation2 + $0x178] sm:$0xff]
    %v814 = vld [vmem:[#allocation2 + $0x180] sm:$0xff]
    %v815 = vld [vmem:[#allocation2 + $0x188] sm:$0xff]
    %v816 = vld [vmem:[#allocation2 + $0x190] sm:$0xff]
    %v817 = vld [vmem:[#allocation2 + $0x198] sm:$0xff]
    %v818 = vld [vmem:[#allocation2 + $0x1a0] sm:$0xff]
    %v819 = vld [vmem:[#allocation2 + $0x1a8] sm:$0xff]
    %v820 = vld [vmem:[#allocation2 + $0x1b0] sm:$0xff]
    %v821 = vld [vmem:[#allocation2 + $0x1b8] sm:$0xff]
    %v822 = vld [vmem:[#allocation2 + $0x1c0] sm:$0xff]
    %v823 = vld [vmem:[#allocation2 + $0x1c8] sm:$0xff]
    %v824 = vld [vmem:[#allocation2 + $0x1d0] sm:$0xff]
    %v825 = vld [vmem:[#allocation2 + $0x1d8] sm:$0xff]
    %v826 = vld [vmem:[#allocation2 + $0x1e0] sm:$0xff]
    %v827 = vld [vmem:[#allocation2 + $0x1e8] sm:$0xff]
    %v828 = vld [vmem:[#allocation2 + $0x1f0] sm:$0xff]
    %v829 = vld [vmem:[#allocation2 + $0x1f8] sm:$0xff]
    %v830 = vld [vmem:[%s2] sm:$0x1]
    %v832 = vperm.slane %v830, 0
    %v834 = vadd.f32 %v766, %v832
    %v835 = vadd.f32 %v767, %v832
    %v836 = vadd.f32 %v768, %v832
    %v837 = vadd.f32 %v769, %v832
    %v838 = vadd.f32 %v770, %v832
    %v839 = vadd.f32 %v771, %v832
    %v840 = vadd.f32 %v772, %v832
    %v841 = vadd.f32 %v773, %v832
    %v842 = vadd.f32 %v774, %v832
    %v843 = vadd.f32 %v775, %v832
    %v844 = vadd.f32 %v776, %v832
    %v845 = vadd.f32 %v777, %v832
    %v846 = vadd.f32 %v778, %v832
    %v847 = vadd.f32 %v779, %v832
    %v848 = vadd.f32 %v780, %v832
    %v849 = vadd.f32 %v781, %v832
    %v850 = vadd.f32 %v782, %v832
    %v851 = vadd.f32 %v783, %v832
    %v852 = vadd.f32 %v784, %v832
    %v853 = vadd.f32 %v785, %v832
    %v854 = vadd.f32 %v786, %v832
    %v855 = vadd.f32 %v787, %v832
    %v856 = vadd.f32 %v788, %v832
    %v857 = vadd.f32 %v789, %v832
    %v858 = vadd.f32 %v790, %v832
    %v859 = vadd.f32 %v791, %v832
    %v860 = vadd.f32 %v792, %v832
    %v861 = vadd.f32 %v793, %v832
    %v862 = vadd.f32 %v794, %v832
    %v863 = vadd.f32 %v795, %v832
    %v864 = vadd.f32 %v796, %v832
    %v865 = vadd.f32 %v797, %v832
    %v866 = vadd.f32 %v798, %v832
    %v867 = vadd.f32 %v799, %v832
    %v868 = vadd.f32 %v800, %v832
    %v869 = vadd.f32 %v801, %v832
    %v870 = vadd.f32 %v802, %v832
    %v871 = vadd.f32 %v803, %v832
    %v872 = vadd.f32 %v804, %v832
    %v873 = vadd.f32 %v805, %v832
    %v874 = vadd.f32 %v806, %v832
    %v875 = vadd.f32 %v807, %v832
    %v876 = vadd.f32 %v808, %v832
    %v877 = vadd.f32 %v809, %v832
    %v878 = vadd.f32 %v810, %v832
    %v879 = vadd.f32 %v811, %v832
    %v880 = vadd.f32 %v812, %v832
    %v881 = vadd.f32 %v813, %v832
    %v882 = vadd.f32 %v814, %v832
    %v883 = vadd.f32 %v815, %v832
    %v884 = vadd.f32 %v816, %v832
    %v885 = vadd.f32 %v817, %v832
    %v886 = vadd.f32 %v818, %v832
    %v887 = vadd.f32 %v819, %v832
    %v888 = vadd.f32 %v820, %v832
    %v889 = vadd.f32 %v821, %v832
    %v890 = vadd.f32 %v822, %v832
    %v891 = vadd.f32 %v823, %v832
    %v892 = vadd.f32 %v824, %v832
    %v893 = vadd.f32 %v825, %v832
    %v894 = vadd.f32 %v826, %v832
    %v895 = vadd.f32 %v827, %v832
    %v896 = vadd.f32 %v828, %v832
    %v897 = vadd.f32 %v829, %v832
    %v898 = vmul.f32 %v834, 0.1
    %v899 = vmul.f32 %v835, 0.1
    %v900 = vmul.f32 %v836, 0.1
    %v901 = vmul.f32 %v837, 0.1
    %v902 = vmul.f32 %v838, 0.1
    %v903 = vmul.f32 %v839, 0.1
    %v904 = vmul.f32 %v840, 0.1
    %v905 = vmul.f32 %v841, 0.1
    %v906 = vmul.f32 %v842, 0.1
    %v907 = vmul.f32 %v843, 0.1
    %v908 = vmul.f32 %v844, 0.1
    %v909 = vmul.f32 %v845, 0.1
    %v910 = vmul.f32 %v846, 0.1
    %v911 = vmul.f32 %v847, 0.1
    %v912 = vmul.f32 %v848, 0.1
    %v913 = vmul.f32 %v849, 0.1
    %v914 = vmul.f32 %v850, 0.1
    %v915 = vmul.f32 %v851, 0.1
    %v916 = vmul.f32 %v852, 0.1
    %v917 = vmul.f32 %v853, 0.1
    %v918 = vmul.f32 %v854, 0.1
    %v919 = vmul.f32 %v855, 0.1
    %v920 = vmul.f32 %v856, 0.1
    %v921 = vmul.f32 %v857, 0.1
    %v922 = vmul.f32 %v858, 0.1
    %v923 = vmul.f32 %v859, 0.1
    %v924 = vmul.f32 %v860, 0.1
    %v925 = vmul.f32 %v861, 0.1
    %v926 = vmul.f32 %v862, 0.1
    %v927 = vmul.f32 %v863, 0.1
    %v928 = vmul.f32 %v864, 0.1
    %v929 = vmul.f32 %v865, 0.1
    %v930 = vmul.f32 %v866, 0.1
    %v931 = vmul.f32 %v867, 0.1
    %v932 = vmul.f32 %v868, 0.1
    %v933 = vmul.f32 %v869, 0.1
    %v934 = vmul.f32 %v870, 0.1
    %v935 = vmul.f32 %v871, 0.1
    %v936 = vmul.f32 %v872, 0.1
    %v937 = vmul.f32 %v873, 0.1
    %v938 = vmul.f32 %v874, 0.1
    %v939 = vmul.f32 %v875, 0.1
    %v940 = vmul.f32 %v876, 0.1
    %v941 = vmul.f32 %v877, 0.1
    %v942 = vmul.f32 %v878, 0.1
    %v943 = vmul.f32 %v879, 0.1
    %v944 = vmul.f32 %v880, 0.1
    %v945 = vmul.f32 %v881, 0.1
    %v946 = vmul.f32 %v882, 0.1
    %v947 = vmul.f32 %v883, 0.1
    %v948 = vmul.f32 %v884, 0.1
    %v949 = vmul.f32 %v885, 0.1
    %v950 = vmul.f32 %v886, 0.1
    %v951 = vmul.f32 %v887, 0.1
    %v952 = vmul.f32 %v888, 0.1
    %v953 = vmul.f32 %v889, 0.1
    %v954 = vmul.f32 %v890, 0.1
    %v955 = vmul.f32 %v891, 0.1
    %v956 = vmul.f32 %v892, 0.1
    %v957 = vmul.f32 %v893, 0.1
    %v958 = vmul.f32 %v894, 0.1
    %v959 = vmul.f32 %v895, 0.1
    %v960 = vmul.f32 %v896, 0.1
    %v961 = vmul.f32 %v897, 0.1
    %v962 = vmax.f32 %v834, %v898
    %v963 = vmax.f32 %v835, %v899
    %v964 = vmax.f32 %v836, %v900
    %v965 = vmax.f32 %v837, %v901
    %v966 = vmax.f32 %v838, %v902
    %v967 = vmax.f32 %v839, %v903
    %v968 = vmax.f32 %v840, %v904
    %v969 = vmax.f32 %v841, %v905
    %v970 = vmax.f32 %v842, %v906
    %v971 = vmax.f32 %v843, %v907
    %v972 = vmax.f32 %v844, %v908
    %v973 = vmax.f32 %v845, %v909
    %v974 = vmax.f32 %v846, %v910
    %v975 = vmax.f32 %v847, %v911
    %v976 = vmax.f32 %v848, %v912
    %v977 = vmax.f32 %v849, %v913
    %v978 = vmax.f32 %v850, %v914
    %v979 = vmax.f32 %v851, %v915
    %v980 = vmax.f32 %v852, %v916
    %v981 = vmax.f32 %v853, %v917
    %v982 = vmax.f32 %v854, %v918
    %v983 = vmax.f32 %v855, %v919
    %v984 = vmax.f32 %v856, %v920
    %v985 = vmax.f32 %v857, %v921
    %v986 = vmax.f32 %v858, %v922
    %v987 = vmax.f32 %v859, %v923
    %v988 = vmax.f32 %v860, %v924
    %v989 = vmax.f32 %v861, %v925
    %v990 = vmax.f32 %v862, %v926
    %v991 = vmax.f32 %v863, %v927
    %v992 = vmax.f32 %v864, %v928
    %v993 = vmax.f32 %v865, %v929
    %v994 = vmax.f32 %v866, %v930
    %v995 = vmax.f32 %v867, %v931
    %v996 = vmax.f32 %v868, %v932
    %v997 = vmax.f32 %v869, %v933
    %v998 = vmax.f32 %v870, %v934
    %v999 = vmax.f32 %v871, %v935
    %v1000 = vmax.f32 %v872, %v936
    %v1001 = vmax.f32 %v873, %v937
    %v1002 = vmax.f32 %v874, %v938
    %v1003 = vmax.f32 %v875, %v939
    %v1004 = vmax.f32 %v876, %v940
    %v1005 = vmax.f32 %v877, %v941
    %v1006 = vmax.f32 %v878, %v942
    %v1007 = vmax.f32 %v879, %v943
    %v1008 = vmax.f32 %v880, %v944
    %v1009 = vmax.f32 %v881, %v945
    %v1010 = vmax.f32 %v882, %v946
    %v1011 = vmax.f32 %v883, %v947
    %v1012 = vmax.f32 %v884, %v948
    %v1013 = vmax.f32 %v885, %v949
    %v1014 = vmax.f32 %v886, %v950
    %v1015 = vmax.f32 %v887, %v951
    %v1016 = vmax.f32 %v888, %v952
    %v1017 = vmax.f32 %v889, %v953
    %v1018 = vmax.f32 %v890, %v954
    %v1019 = vmax.f32 %v891, %v955
    %v1020 = vmax.f32 %v892, %v956
    %v1021 = vmax.f32 %v893, %v957
    %v1022 = vmax.f32 %v894, %v958
    %v1023 = vmax.f32 %v895, %v959
    %v1024 = vmax.f32 %v896, %v960
    %v1025 = vmax.f32 %v897, %v961
    %1026 = vst [vmem:[%s3] sm:$0xff] %v962
    %1027 = vst [vmem:[%s3 + $0x8] sm:$0xff] %v963
    %1028 = vst [vmem:[%s3 + $0x10] sm:$0xff] %v964
    %1029 = vst [vmem:[%s3 + $0x18] sm:$0xff] %v965
    %1030 = vst [vmem:[%s3 + $0x20] sm:$0xff] %v966
    %1031 = vst [vmem:[%s3 + $0x28] sm:$0xff] %v967
    %1032 = vst [vmem:[%s3 + $0x30] sm:$0xff] %v968
    %1033 = vst [vmem:[%s3 + $0x38] sm:$0xff] %v969
    %1034 = vst [vmem:[%s3 + $0x40] sm:$0xff] %v970
    %1035 = vst [vmem:[%s3 + $0x48] sm:$0xff] %v971
    %1036 = vst [vmem:[%s3 + $0x50] sm:$0xff] %v972
    %1037 = vst [vmem:[%s3 + $0x58] sm:$0xff] %v973
    %1038 = vst [vmem:[%s3 + $0x60] sm:$0xff] %v974
    %1039 = vst [vmem:[%s3 + $0x68] sm:$0xff] %v975
    %1040 = vst [vmem:[%s3 + $0x70] sm:$0xff] %v976
    %1041 = vst [vmem:[%s3 + $0x78] sm:$0xff] %v977
    %1042 = vst [vmem:[%s3 + $0x80] sm:$0xff] %v978
    %1043 = vst [vmem:[%s3 + $0x88] sm:$0xff] %v979
    %1044 = vst [vmem:[%s3 + $0x90] sm:$0xff] %v980
    %1045 = vst [vmem:[%s3 + $0x98] sm:$0xff] %v981
    %1046 = vst [vmem:[%s3 + $0xa0] sm:$0xff] %v982
    %1047 = vst [vmem:[%s3 + $0xa8] sm:$0xff] %v983
    %1048 = vst [vmem:[%s3 + $0xb0] sm:$0xff] %v984
    %1049 = vst [vmem:[%s3 + $0xb8] sm:$0xff] %v985
    %1050 = vst [vmem:[%s3 + $0xc0] sm:$0xff] %v986
    %1051 = vst [vmem:[%s3 + $0xc8] sm:$0xff] %v987
    %1052 = vst [vmem:[%s3 + $0xd0] sm:$0xff] %v988
    %1053 = vst [vmem:[%s3 + $0xd8] sm:$0xff] %v989
    %1054 = vst [vmem:[%s3 + $0xe0] sm:$0xff] %v990
    %1055 = vst [vmem:[%s3 + $0xe8] sm:$0xff] %v991
    %1056 = vst [vmem:[%s3 + $0xf0] sm:$0xff] %v992
    %1057 = vst [vmem:[%s3 + $0xf8] sm:$0xff] %v993
    %1058 = vst [vmem:[%s3 + $0x100] sm:$0xff] %v994
    %1059 = vst [vmem:[%s3 + $0x108] sm:$0xff] %v995
    %1060 = vst [vmem:[%s3 + $0x110] sm:$0xff] %v996
    %1061 = vst [vmem:[%s3 + $0x118] sm:$0xff] %v997
    %1062 = vst [vmem:[%s3 + $0x120] sm:$0xff] %v998
    %1063 = vst [vmem:[%s3 + $0x128] sm:$0xff] %v999
    %1064 = vst [vmem:[%s3 + $0x130] sm:$0xff] %v1000
    %1065 = vst [vmem:[%s3 + $0x138] sm:$0xff] %v1001
    %1066 = vst [vmem:[%s3 + $0x140] sm:$0xff] %v1002
    %1067 = vst [vmem:[%s3 + $0x148] sm:$0xff] %v1003
    %1068 = vst [vmem:[%s3 + $0x150] sm:$0xff] %v1004
    %1069 = vst [vmem:[%s3 + $0x158] sm:$0xff] %v1005
    %1070 = vst [vmem:[%s3 + $0x160] sm:$0xff] %v1006
    %1071 = vst [vmem:[%s3 + $0x168] sm:$0xff] %v1007
    %1072 = vst [vmem:[%s3 + $0x170] sm:$0xff] %v1008
    %1073 = vst [vmem:[%s3 + $0x178] sm:$0xff] %v1009
    %1074 = vst [vmem:[%s3 + $0x180] sm:$0xff] %v1010
    %1075 = vst [vmem:[%s3 + $0x188] sm:$0xff] %v1011
    %1076 = vst [vmem:[%s3 + $0x190] sm:$0xff] %v1012
    %1077 = vst [vmem:[%s3 + $0x198] sm:$0xff] %v1013
    %1078 = vst [vmem:[%s3 + $0x1a0] sm:$0xff] %v1014
    %1079 = vst [vmem:[%s3 + $0x1a8] sm:$0xff] %v1015
    %1080 = vst [vmem:[%s3 + $0x1b0] sm:$0xff] %v1016
    %1081 = vst [vmem:[%s3 + $0x1b8] sm:$0xff] %v1017
    %1082 = vst [vmem:[%s3 + $0x1c0] sm:$0xff] %v1018
    %1083 = vst [vmem:[%s3 + $0x1c8] sm:$0xff] %v1019
    %1084 = vst [vmem:[%s3 + $0x1d0] sm:$0xff] %v1020
    %1085 = vst [vmem:[%s3 + $0x1d8] sm:$0xff] %v1021
    %1086 = vst [vmem:[%s3 + $0x1e0] sm:$0xff] %v1022
    %1087 = vst [vmem:[%s3 + $0x1e8] sm:$0xff] %v1023
    %1088 = vst [vmem:[%s3 + $0x1f0] sm:$0xff] %v1024
    %1089 = vst [vmem:[%s3 + $0x1f8] sm:$0xff] %v1025
  $region21: #{conv_bn_leakyrelu.1} parent=0 // pred_fallthru
    _
  // Predicated region
  $region22: #{conv_bn_leakyrelu.1} parent=0 // pred_check
    _
  $region23: #{conv_bn_leakyrelu.1} parent=0 // pred_check_branch
    %1091 = sbr.rel (0) target = $region25
  $region24: #{conv_bn_leakyrelu.1} parent=0 // pred_region
    _
  $region25: #{conv_bn_leakyrelu.1} parent=0 // pred_fallthru
    _
  // Predicated region
  $region26: #{conv_bn_leakyrelu.1} parent=0 // pred_check
    _
  $region27: #{conv_bn_leakyrelu.1} parent=0 // pred_check_branch
    %1093 = sbr.rel (0) target = $region29
  $region28: #{conv_bn_leakyrelu.1} parent=0 // pred_region
    _
  $region29: #{conv_bn_leakyrelu.1} parent=0 // pred_fallthru
    _

</llo_original>
